<compile_context>
chip_gen: v7x
topology: tpu7x:2x2x1
jax: 0.10.0
libtpu: 0.0.40
codegen_flags: <defaults>
</compile_context>

<pallas_src>
import jax
import jax.numpy as jnp
from jax.experimental import pallas as pl
from jax.experimental.pallas import tpu as pltpu


def _round_up(x, m):
    return ((x + m - 1) // m) * m


def policy_net_kernel(x_ref, w1_ref, b1_ref, w2_ref, b2_ref, out_ref):
    # x_ref:  (Bt, D_in)      w1_ref: (D_in, H)   b1_ref: (1, H)
    # w2_ref: (H, D_out)      b2_ref: (1, D_out)  out_ref: (Bt, D_out)
    x = x_ref[...]

    # fc1 + bias (VPU broadcast add) + ReLU.
    h = jnp.maximum(
        jnp.dot(x, w1_ref[...], preferred_element_type=jnp.float32)
        + b1_ref[...],
        0.0)

    # fc2 + bias.
    logits = (jnp.dot(h, w2_ref[...], preferred_element_type=jnp.float32)
              + b2_ref[...])

    # Row softmax (== torch softmax(dim=0) on a 1-D observation).
    m = jnp.max(logits, axis=-1, keepdims=True)
    e = jnp.exp(logits - m)
    out_ref[...] = e / jnp.sum(e, axis=-1, keepdims=True)   # exact division


def pack_params(w1, b1, w2, b2):
    """Return f32 params shaped for the kernel: biases as (1, N) rows.

    w1: (D_in, H), b1: (H,), w2: (H, D_out), b2: (D_out,)
    (weights stored (in_features, out_features) == PyTorch Linear weight.T)
    """
    return (w1.astype(jnp.float32),
            b1.astype(jnp.float32).reshape(1, -1),
            w2.astype(jnp.float32),
            b2.astype(jnp.float32).reshape(1, -1))


def policy_net_forward(x, params, *, block_b=256):
    """x: (D_in,) or (B, D_in) float -> probs: (D_out,) or (B, D_out)."""
    w1, b1, w2, b2 = params
    d_in, h = w1.shape
    d_out = w2.shape[1]

    single = (x.ndim == 1)
    x2 = x[None, :] if single else x
    b = x2.shape[0]

    # One tile for small/medium batches (serial grid on v5e/v6e => extra steps
    # are pure overhead); cap tile height at block_b so big rollouts split into
    # multiple "parallel" tiles that v7x shards across its two TensorCores.
    block_b_eff = min(block_b, _round_up(b, 8))
    b_pad = _round_up(b, block_b_eff)

    x2 = x2.astype(jnp.float32)
    if b_pad != b:
        x2 = jnp.pad(x2, ((0, b_pad - b), (0, 0)))   # cheap: only (B, D_in)

    grid = (b_pad // block_b_eff,)

    cost = pl.CostEstimate(
        flops=2 * b_pad * (d_in * h + h * d_out),
        transcendentals=b_pad * d_out,
        bytes_accessed=4 * (b_pad * d_in + d_in * h + h
                            + h * d_out + d_out + b_pad * d_out))

    out = pl.pallas_call(
        policy_net_kernel,
        out_shape=jax.ShapeDtypeStruct((b_pad, d_out), jnp.float32),
        grid=grid,
        in_specs=[
            # x tile: last block dim == full array dim (legal, unpadded).
            pl.BlockSpec((block_b_eff, d_in), lambda i: (i, 0)),
            # Weights / biases: full blocks, constant index_map -> VMEM-resident
            # across the whole grid (one DMA each, amortized over the batch).
            pl.BlockSpec(w1.shape, lambda i: (0, 0)),
            pl.BlockSpec(b1.shape, lambda i: (0, 0)),
            pl.BlockSpec(w2.shape, lambda i: (0, 0)),
            pl.BlockSpec(b2.shape, lambda i: (0, 0)),
        ],
        out_specs=pl.BlockSpec((block_b_eff, d_out), lambda i: (i, 0)),
        compiler_params=pltpu.CompilerParams(
            dimension_semantics=("parallel",)),     # 2 TCs on v7x, no-op else
        cost_estimate=cost,
    )(x2, w1, b1, w2, b2)

    probs = out[:b]
    return probs[0] if single else probs


def init_params(key, input_size, output_size, hidden_layer_size):
    """Deterministic init mimicking torch.nn.Linear (U[-1/sqrt(fan_in), +])."""
    k1, k2, k3, k4 = jax.random.split(key, 4)
    bound1 = 1.0 / jnp.sqrt(jnp.float32(input_size))
    bound2 = 1.0 / jnp.sqrt(jnp.float32(hidden_layer_size))
    # stored as (in_features, out_features) == PyTorch weight transposed
    w1 = jax.random.uniform(k1, (input_size, hidden_layer_size), jnp.float32,
                            -bound1, bound1)
    b1 = jax.random.uniform(k2, (hidden_layer_size,), jnp.float32,
                            -bound1, bound1)
    w2 = jax.random.uniform(k3, (hidden_layer_size, output_size), jnp.float32,
                            -bound2, bound2)
    b2 = jax.random.uniform(k4, (output_size,), jnp.float32, -bound2, bound2)
    return w1, b1, w2, b2


# TODO(synk): get_action_and_logp / act (Categorical sampling) are host-side
# RNG utilities, not part of the forward pass, and are not implemented here.


if __name__ == "__main__":
    # Small shapes consistent with the module (e.g. LunarLander-ish policy).
    input_size = 8
    output_size = 4
    hidden_layer_size = 256   # module default
    batch = 64                # small batched rollout of observations

    key = jax.random.PRNGKey(0)
    kx, kp = jax.random.split(key)
    xb = jax.random.normal(kx, (batch, input_size), jnp.float32)
    w1, b1, w2, b2 = init_params(kp, input_size, output_size, hidden_layer_size)
    params = pack_params(w1, b1, w2, b2)

    # Batched forward (single 64-row tile, grid=(1,)).
    probs = policy_net_forward(xb, params)
    probs = jax.block_until_ready(probs)

    # Single-observation path (matches the PyTorch forward on a 1-D obs).
    probs1 = policy_net_forward(xb[0], params)
    probs1 = jax.block_until_ready(probs1)

    # Pure-JAX reference.
    h_ref = jnp.maximum(xb @ w1 + b1, 0.0)
    logits_ref = h_ref @ w2 + b2
    probs_ref = jax.nn.softmax(logits_ref, axis=-1)

    assert probs.shape == (batch, output_size)
    assert probs1.shape == (output_size,)
    # Tolerances robust to MXU-vs-XLA f32 matmul precision-mode differences.
    assert jnp.allclose(probs, probs_ref, atol=1e-3, rtol=1e-3)
    assert jnp.allclose(probs1, probs_ref[0], atol=1e-3, rtol=1e-3)
    assert jnp.allclose(jnp.sum(probs, axis=-1), 1.0, atol=1e-5)
    assert jnp.allclose(jnp.sum(probs1), 1.0, atol=1e-5)

    print("KERNEL_OK")
</pallas_src>

<mosaic_0001>
module attributes {stable_mosaic.version = 11 : i64} {
  func.func @policy_net_kernel(%arg0: i32, %arg1: memref<64x8xf32, #tpu.memory_space<vmem>>, %arg2: memref<8x256xf32, #tpu.memory_space<vmem>>, %arg3: memref<1x256xf32, #tpu.memory_space<vmem>>, %arg4: memref<256x4xf32, #tpu.memory_space<vmem>>, %arg5: memref<1x4xf32, #tpu.memory_space<vmem>>, %arg6: memref<64x4xf32, #tpu.memory_space<vmem>>) attributes {dimension_semantics = [#tpu.dimension_semantics<parallel>], iteration_bounds = array<i64: 1>, scalar_prefetch = 0 : i64, scratch_operands = 0 : i64, tpu.core_type = #tpu.core_type<tc>, window_params = [{transform_indices = @transform_0, window_bounds = array<i64: 64, 8>}, {pipeline_mode = #tpu.pipeline_mode<synchronous>, transform_indices = @transform_1, window_bounds = array<i64: 8, 256>}, {pipeline_mode = #tpu.pipeline_mode<synchronous>, transform_indices = @transform_2, window_bounds = array<i64: 1, 256>}, {pipeline_mode = #tpu.pipeline_mode<synchronous>, transform_indices = @transform_3, window_bounds = array<i64: 256, 4>}, {pipeline_mode = #tpu.pipeline_mode<synchronous>, transform_indices = @transform_4, window_bounds = array<i64: 1, 4>}, {transform_indices = @transform_5, window_bounds = array<i64: 64, 4>}]} {
    %c0 = arith.constant 0 : index
    %c0_0 = arith.constant 0 : index
    %0 = vector.load %arg1[%c0, %c0_0] : memref<64x8xf32, #tpu.memory_space<vmem>>, vector<64x8xf32>
    %c0_1 = arith.constant 0 : index
    %c0_2 = arith.constant 0 : index
    %1 = vector.load %arg2[%c0_1, %c0_2] : memref<8x256xf32, #tpu.memory_space<vmem>>, vector<8x256xf32>
    %cst = arith.constant dense<0.000000e+00> : vector<64x256xf32>
    %2 = tpu.matmul %0, %1, %cst {dimension_numbers = #tpu.dot_dimension_numbers<[1], [0], [0], [1], [0, 0, 1, 1], [], []>} : vector<64x8xf32>, vector<8x256xf32>, vector<64x256xf32> -> vector<64x256xf32>
    %c0_3 = arith.constant 0 : index
    %c0_4 = arith.constant 0 : index
    %3 = vector.load %arg3[%c0_3, %c0_4] : memref<1x256xf32, #tpu.memory_space<vmem>>, vector<1x256xf32>
    %4 = vector.broadcast %3 : vector<1x256xf32> to vector<64x256xf32>
    %5 = arith.addf %2, %4 : vector<64x256xf32>
    %cst_5 = arith.constant 0.000000e+00 : f32
    %6 = vector.broadcast %cst_5 : f32 to vector<64x256xf32>
    %7 = arith.maximumf %5, %6 : vector<64x256xf32>
    %c0_6 = arith.constant 0 : index
    %c0_7 = arith.constant 0 : index
    %8 = vector.load %arg4[%c0_6, %c0_7] : memref<256x4xf32, #tpu.memory_space<vmem>>, vector<256x4xf32>
    %cst_8 = arith.constant dense<0.000000e+00> : vector<64x4xf32>
    %9 = tpu.matmul %7, %8, %cst_8 {dimension_numbers = #tpu.dot_dimension_numbers<[1], [0], [0], [1], [0, 0, 1, 1], [], []>} : vector<64x256xf32>, vector<256x4xf32>, vector<64x4xf32> -> vector<64x4xf32>
    %c0_9 = arith.constant 0 : index
    %c0_10 = arith.constant 0 : index
    %10 = vector.load %arg5[%c0_9, %c0_10] : memref<1x4xf32, #tpu.memory_space<vmem>>, vector<1x4xf32>
    %11 = vector.broadcast %10 : vector<1x4xf32> to vector<64x4xf32>
    %12 = arith.addf %9, %11 : vector<64x4xf32>
    %cst_11 = arith.constant dense<0xFF800000> : vector<64xf32>
    %13 = vector.multi_reduction <maximumf>, %12, %cst_11 [1] : vector<64x4xf32> to vector<64xf32>
    %14 = vector.shape_cast %13 : vector<64xf32> to vector<64x1xf32>
    %15 = vector.broadcast %14 : vector<64x1xf32> to vector<64x4xf32>
    %16 = arith.subf %12, %15 : vector<64x4xf32>
    %17 = math.exp %16 : vector<64x4xf32>
    %cst_12 = arith.constant dense<0.000000e+00> : vector<64xf32>
    %18 = vector.multi_reduction <add>, %17, %cst_12 [1] : vector<64x4xf32> to vector<64xf32>
    %19 = vector.shape_cast %18 : vector<64xf32> to vector<64x1xf32>
    %20 = vector.broadcast %19 : vector<64x1xf32> to vector<64x4xf32>
    %21 = arith.divf %17, %20 : vector<64x4xf32>
    %c0_13 = arith.constant 0 : index
    %c0_14 = arith.constant 0 : index
    %22 = vector.load %arg6[%c0_13, %c0_14] : memref<64x4xf32, #tpu.memory_space<vmem>>, vector<64x4xf32>
    tpu.vector_store %arg6[%c0_13, %c0_14], %21 {strides = array<i32>} : memref<64x4xf32, #tpu.memory_space<vmem>>, vector<64x4xf32>,
    return
  }
  func.func @transform_0(%arg0: i32) -> (i32, i32) {
    %c0_i32 = arith.constant 0 : i32
    %c0_i32_0 = arith.constant 0 : i32
    return %arg0, %c0_i32 : i32, i32
  }
  func.func @transform_1(%arg0: i32) -> (i32, i32) {
    %c0_i32 = arith.constant 0 : i32
    %c0_i32_0 = arith.constant 0 : i32
    %c0_i32_1 = arith.constant 0 : i32
    return %c0_i32, %c0_i32_0 : i32, i32
  }
  func.func @transform_2(%arg0: i32) -> (i32, i32) {
    %c0_i32 = arith.constant 0 : i32
    %c0_i32_0 = arith.constant 0 : i32
    %c0_i32_1 = arith.constant 0 : i32
    return %c0_i32, %c0_i32_0 : i32, i32
  }
  func.func @transform_3(%arg0: i32) -> (i32, i32) {
    %c0_i32 = arith.constant 0 : i32
    %c0_i32_0 = arith.constant 0 : i32
    %c0_i32_1 = arith.constant 0 : i32
    return %c0_i32, %c0_i32_0 : i32, i32
  }
  func.func @transform_4(%arg0: i32) -> (i32, i32) {
    %c0_i32 = arith.constant 0 : i32
    %c0_i32_0 = arith.constant 0 : i32
    %c0_i32_1 = arith.constant 0 : i32
    return %c0_i32, %c0_i32_0 : i32, i32
  }
  func.func @transform_5(%arg0: i32) -> (i32, i32) {
    %c0_i32 = arith.constant 0 : i32
    %c0_i32_0 = arith.constant 0 : i32
    return %arg0, %c0_i32 : i32, i32
  }
}

</mosaic_0001>

<llo_original>
// kernel: tpu_custom_call.1
$region0: #{tpu_custom_call.1}
  #allocation0 [shape = 'u32[]', space=smem, size = 0x4, offset = 0x4, fixed_abs, tag = 'smem constant byte address 0x4 - core index']
  #allocation1 [shape = 'u32[144,128]{1,0:T(1,128)}', space=vmem, size = 0x12000, scoped, tag = 'internal scratch']
  %s0 = inlined_call_operand.vmem [shape: f32[64,8], index: 0, kind: input, shape index: {}]
  %s1 = inlined_call_operand.vmem [shape: f32[8,256], index: 1, kind: input, shape index: {}]
  %s2 = inlined_call_operand.vmem [shape: f32[1,256], index: 2, kind: input, shape index: {}]
  %s3 = inlined_call_operand.vmem [shape: f32[256,4], index: 3, kind: input, shape index: {}]
  %s4 = inlined_call_operand.vmem [shape: f32[1,4], index: 4, kind: input, shape index: {}]
  %s5 = inlined_call_operand.vmem [shape: f32[64,4], index: 5, kind: output, shape index: {}]
  %s6 = sld [smem:[#allocation0]]
  $region30: #{tpu_custom_call.1} parent=0
    _
  %s8 = ssub.s32 1, %s6
  %s9 = scalar_select 0, %s8, %s6
  // Predicated region
  $region2: #{tpu_custom_call.1} parent=0 // pred_check
    _
  $region3: #{tpu_custom_call.1} parent=0 // pred_check_branch
    %11 = sbr.rel (0) target = $region5
  $region4: #{tpu_custom_call.1} parent=0 // pred_region
    _
  $region5: #{tpu_custom_call.1} parent=0 // pred_fallthru
    _
  // Predicated region
  $region6: #{tpu_custom_call.1} parent=0 // pred_check
    _
  $region7: #{tpu_custom_call.1} parent=0 // pred_check_branch
    %13 = sbr.rel (0) target = $region9
  $region8: #{tpu_custom_call.1} parent=0 // pred_region
    _
  $region9: #{tpu_custom_call.1} parent=0 // pred_fallthru
    _
  // Predicated region
  $region10: #{tpu_custom_call.1} parent=0 // pred_check
    _
  $region11: #{tpu_custom_call.1} parent=0 // pred_check_branch
    %15 = sbr.rel (0) target = $region13
  $region12: #{tpu_custom_call.1} parent=0 // pred_region
    _
  $region13: #{tpu_custom_call.1} parent=0 // pred_fallthru
    _
  // Predicated region
  $region14: #{tpu_custom_call.1} parent=0 // pred_check
    _
  $region15: #{tpu_custom_call.1} parent=0 // pred_check_branch
    %17 = sbr.rel (0) target = $region17
  $region16: #{tpu_custom_call.1} parent=0 // pred_region
    _
  $region17: #{tpu_custom_call.1} parent=0 // pred_fallthru
    _
  // Predicated region
  $region18: #{tpu_custom_call.1} parent=0 // pred_check
    _
  $region19: #{tpu_custom_call.1} parent=0 // pred_check_branch
    %19 = sbr.rel (0) target = $region21
  $region20: #{tpu_custom_call.1} parent=0 // pred_region
    _
  $region21: #{tpu_custom_call.1} parent=0 // pred_fallthru
    _
  %v20 = vld [vmem:[%s0] sm:$0xff]
  %v21 = vld [vmem:[%s0 + $0x8] sm:$0xff]
  %v22 = vld [vmem:[%s0 + $0x10] sm:$0xff]
  %v23 = vld [vmem:[%s0 + $0x18] sm:$0xff]
  %v24 = vld [vmem:[%s0 + $0x20] sm:$0xff]
  %v25 = vld [vmem:[%s0 + $0x28] sm:$0xff]
  %v26 = vld [vmem:[%s0 + $0x30] sm:$0xff]
  %v27 = vld [vmem:[%s0 + $0x38] sm:$0xff]
  %v28 = vld [vmem:[%s1] sm:$0xff]
  %v29 = vld [vmem:[%s1 + $0x8] sm:$0xff]
  %v30 = vld [vmem:[%s2] sm:$0x3]
  %v32 = vlaneseq
  %v33 = vshrl.u32 %v32, 7
  %v34 = vsub.s32 0, %v33
  %v35 = vrot.slane %v30, %v34
  %v36 = vlaneseq
  %v37 = vshrl.u32 %v36, 7
  %v38 = vsub.s32 1, %v37
  %v39 = vrot.slane %v30, %v38
  %vm42 = vcmask 64512
  %v44 = vsel %vm42, %v20, 0
  %v47 = vsel %vm42, %v21, 0
  %v50 = vsel %vm42, %v22, 0
  %v53 = vsel %vm42, %v23, 0
  %v56 = vsel %vm42, %v24, 0
  %v59 = vsel %vm42, %v25, 0
  %v62 = vsel %vm42, %v26, 0
  %v65 = vsel %vm42, %v27, 0
  %67 = vmatprep.subr.mxu0 %v29
  %68 = vmatpush1.msra.mxu0 %v28
  %69 = vmatprep.subr.mxu0 0.0
  %70 = vmatpush1.msra.mxu0 0.0
  %71 = vmatprep.subr.mxu0 0.0
  %72 = vmatpush1.msra.mxu0 0.0
  %73 = vmatprep.subr.mxu0 0.0
  %74 = vmatpush1.msra.mxu0 0.0
  %75 = vmatprep.subr.mxu0 0.0
  %76 = vmatpush1.msra.mxu0 0.0
  %77 = vmatprep.subr.mxu0 0.0
  %78 = vmatpush1.msra.mxu0 0.0
  %79 = vmatprep.subr.mxu0 0.0
  %80 = vmatpush1.msra.mxu0 0.0
  %81 = vmatprep.subr.mxu0 0.0
  %82 = vmatpush1.msra.mxu0 0.0
  %83 = vmatprep.subr.mxu0 0.0
  %84 = vmatpush1.msra.mxu0 0.0
  %85 = vmatprep.subr.mxu0 0.0
  %86 = vmatpush1.msra.mxu0 0.0
  %87 = vmatprep.subr.mxu0 0.0
  %88 = vmatpush1.msra.mxu0 0.0
  %89 = vmatprep.subr.mxu0 0.0
  %90 = vmatpush1.msra.mxu0 0.0
  %91 = vmatprep.subr.mxu0 0.0
  %92 = vmatpush1.msra.mxu0 0.0
  %93 = vmatprep.subr.mxu0 0.0
  %94 = vmatpush1.msra.mxu0 0.0
  %95 = vmatprep.subr.mxu0 0.0
  %96 = vmatpush1.msra.mxu0 0.0
  %97 = vmatprep.subr.mxu0 0.0
  %98 = vmatpush1.msra.mxu0 0.0
  %99 = vmatprep.subr.mxu0 0.0
  %100 = vmatpush1.msra.mxu0 0.0
  %101 = vmatprep.subr.mxu0 0.0
  %102 = vmatpush1.msra.mxu0 0.0
  %103 = vmatprep.subr.mxu0 0.0
  %104 = vmatpush1.msra.mxu0 0.0
  %105 = vmatprep.subr.mxu0 0.0
  %106 = vmatpush1.msra.mxu0 0.0
  %107 = vmatprep.subr.mxu0 0.0
  %108 = vmatpush1.msra.mxu0 0.0
  %109 = vmatprep.subr.mxu0 0.0
  %110 = vmatpush1.msra.mxu0 0.0
  %111 = vmatprep.subr.mxu0 0.0
  %112 = vmatpush1.msra.mxu0 0.0
  %113 = vmatprep.subr.mxu0 0.0
  %114 = vmatpush1.msra.mxu0 0.0
  %115 = vmatprep.subr.mxu0 0.0
  %116 = vmatpush1.msra.mxu0 0.0
  %117 = vmatprep.subr.mxu0 0.0
  %118 = vmatpush1.msra.mxu0 0.0
  %119 = vmatprep.subr.mxu0 0.0
  %120 = vmatpush1.msra.mxu0 0.0
  %121 = vmatprep.subr.mxu0 0.0
  %122 = vmatpush1.msra.mxu0 0.0
  %123 = vmatprep.subr.mxu0 0.0
  %124 = vmatpush1.msra.mxu0 0.0
  %125 = vmatprep.subr.mxu0 0.0
  %126 = vmatpush1.msra.mxu0 0.0
  %127 = vmatprep.subr.mxu0 0.0
  %128 = vmatpush1.msra.mxu0 0.0
  %129 = vmatprep.subr.mxu0 0.0
  %130 = vmatpush1.msra.mxu0 0.0
  %131 = vmatprep.mubr.f32.mxu0 0.0
  %132 = vmatmul.mubr.f32.gmra.mrb[0].mxu0 %v44
  %v133 = vpop.f32.mrb[0].mxu0
  %v134 = vadd.f32 %v35, %v133
  %v135 = vpop.f32.mrb[0].mxu0
  %v136 = vadd.f32 %v39, %v135
  %137 = vmatprep.mubr.f32.mxu0 0.0
  %138 = vmatmul.mubr.f32.gmra.mrb[0].mxu0 %v47
  %v139 = vpop.f32.mrb[0].mxu0
  %v140 = vadd.f32 %v35, %v139
  %v141 = vpop.f32.mrb[0].mxu0
  %v142 = vadd.f32 %v39, %v141
  %143 = vmatprep.mubr.f32.mxu0 0.0
  %144 = vmatmul.mubr.f32.gmra.mrb[0].mxu0 %v50
  %v145 = vpop.f32.mrb[0].mxu0
  %v146 = vadd.f32 %v35, %v145
  %v147 = vpop.f32.mrb[0].mxu0
  %v148 = vadd.f32 %v39, %v147
  %149 = vmatprep.mubr.f32.mxu0 0.0
  %150 = vmatmul.mubr.f32.gmra.mrb[0].mxu0 %v53
  %v151 = vpop.f32.mrb[0].mxu0
  %v152 = vadd.f32 %v35, %v151
  %v153 = vpop.f32.mrb[0].mxu0
  %v154 = vadd.f32 %v39, %v153
  %155 = vmatprep.mubr.f32.mxu0 0.0
  %156 = vmatmul.mubr.f32.gmra.mrb[0].mxu0 %v56
  %v157 = vpop.f32.mrb[0].mxu0
  %v158 = vadd.f32 %v35, %v157
  %v159 = vpop.f32.mrb[0].mxu0
  %v160 = vadd.f32 %v39, %v159
  %161 = vmatprep.mubr.f32.mxu0 0.0
  %162 = vmatmul.mubr.f32.gmra.mrb[0].mxu0 %v59
  %v163 = vpop.f32.mrb[0].mxu0
  %v164 = vadd.f32 %v35, %v163
  %v165 = vpop.f32.mrb[0].mxu0
  %v166 = vadd.f32 %v39, %v165
  %167 = vmatprep.mubr.f32.mxu0 0.0
  %168 = vmatmul.mubr.f32.gmra.mrb[0].mxu0 %v62
  %v169 = vpop.f32.mrb[0].mxu0
  %v170 = vadd.f32 %v35, %v169
  %v171 = vpop.f32.mrb[0].mxu0
  %v172 = vadd.f32 %v39, %v171
  %173 = vmatprep.mubr.f32.mxu0 0.0
  %174 = vmatmul.mubr.f32.gmra.mrb[0].mxu0 %v65
  %v175 = vpop.f32.mrb[0].mxu0
  %v176 = vadd.f32 %v35, %v175
  %v177 = vpop.f32.mrb[0].mxu0
  %v178 = vadd.f32 %v39, %v177
  %179 = vdwg.mxu0
  %v180 = vmax.f32 %v134, 0.0
  %v181 = vmax.f32 %v136, 0.0
  %v182 = vmax.f32 %v140, 0.0
  %v183 = vmax.f32 %v142, 0.0
  %v184 = vmax.f32 %v146, 0.0
  %v185 = vmax.f32 %v148, 0.0
  %v186 = vmax.f32 %v152, 0.0
  %v187 = vmax.f32 %v154, 0.0
  %v188 = vmax.f32 %v158, 0.0
  %v189 = vmax.f32 %v160, 0.0
  %v190 = vmax.f32 %v164, 0.0
  %v191 = vmax.f32 %v166, 0.0
  %v192 = vmax.f32 %v170, 0.0
  %v193 = vmax.f32 %v172, 0.0
  %v194 = vmax.f32 %v176, 0.0
  %v195 = vmax.f32 %v178, 0.0
  %v196 = vld [vmem:[%s3] sm:$0xff]
  %v197 = vld [vmem:[%s3 + $0x8] sm:$0xff]
  %v198 = vld [vmem:[%s3 + $0x10] sm:$0xff]
  %v199 = vld [vmem:[%s3 + $0x18] sm:$0xff]
  %v200 = vld [vmem:[%s3 + $0x20] sm:$0xff]
  %v201 = vld [vmem:[%s3 + $0x28] sm:$0xff]
  %v202 = vld [vmem:[%s3 + $0x30] sm:$0xff]
  %v203 = vld [vmem:[%s3 + $0x38] sm:$0xff]
  %v204 = vld [vmem:[%s3 + $0x40] sm:$0xff]
  %v205 = vld [vmem:[%s3 + $0x48] sm:$0xff]
  %v206 = vld [vmem:[%s3 + $0x50] sm:$0xff]
  %v207 = vld [vmem:[%s3 + $0x58] sm:$0xff]
  %v208 = vld [vmem:[%s3 + $0x60] sm:$0xff]
  %v209 = vld [vmem:[%s3 + $0x68] sm:$0xff]
  %v210 = vld [vmem:[%s3 + $0x70] sm:$0xff]
  %v211 = vld [vmem:[%s3 + $0x78] sm:$0xff]
  %v212 = vld [vmem:[%s3 + $0x80] sm:$0xff]
  %v213 = vld [vmem:[%s3 + $0x88] sm:$0xff]
  %v214 = vld [vmem:[%s3 + $0x90] sm:$0xff]
  %v215 = vld [vmem:[%s3 + $0x98] sm:$0xff]
  %v216 = vld [vmem:[%s3 + $0xa0] sm:$0xff]
  %v217 = vld [vmem:[%s3 + $0xa8] sm:$0xff]
  %v218 = vld [vmem:[%s3 + $0xb0] sm:$0xff]
  %v219 = vld [vmem:[%s3 + $0xb8] sm:$0xff]
  %v220 = vld [vmem:[%s3 + $0xc0] sm:$0xff]
  %v221 = vld [vmem:[%s3 + $0xc8] sm:$0xff]
  %v222 = vld [vmem:[%s3 + $0xd0] sm:$0xff]
  %v223 = vld [vmem:[%s3 + $0xd8] sm:$0xff]
  %v224 = vld [vmem:[%s3 + $0xe0] sm:$0xff]
  %v225 = vld [vmem:[%s3 + $0xe8] sm:$0xff]
  %v226 = vld [vmem:[%s3 + $0xf0] sm:$0xff]
  %v227 = vld [vmem:[%s3 + $0xf8] sm:$0xff]
  %v228 = vld [vmem:[%s4] sm:$0x1]
  %v230 = vlaneseq
  %v231 = vshrl.u32 %v230, 7
  %v232 = vsub.s32 0, %v231
  %v233 = vrot.slane %v228, %v232
  %235 = vmatprep.subr.mxu0 0.0
  %236 = vmatpush1.msra.mxu0 %v196
  %237 = vmatprep.subr.mxu0 0.0
  %238 = vmatpush1.msra.mxu0 %v197
  %239 = vmatprep.subr.mxu0 0.0
  %240 = vmatpush1.msra.mxu0 %v198
  %241 = vmatprep.subr.mxu0 0.0
  %242 = vmatpush1.msra.mxu0 %v199
  %243 = vmatprep.subr.mxu0 0.0
  %244 = vmatpush1.msra.mxu0 %v200
  %245 = vmatprep.subr.mxu0 0.0
  %246 = vmatpush1.msra.mxu0 %v201
  %247 = vmatprep.subr.mxu0 0.0
  %248 = vmatpush1.msra.mxu0 %v202
  %249 = vmatprep.subr.mxu0 0.0
  %250 = vmatpush1.msra.mxu0 %v203
  %251 = vmatprep.subr.mxu0 0.0
  %252 = vmatpush1.msra.mxu0 %v204
  %253 = vmatprep.subr.mxu0 0.0
  %254 = vmatpush1.msra.mxu0 %v205
  %255 = vmatprep.subr.mxu0 0.0
  %256 = vmatpush1.msra.mxu0 %v206
  %257 = vmatprep.subr.mxu0 0.0
  %258 = vmatpush1.msra.mxu0 %v207
  %259 = vmatprep.subr.mxu0 0.0
  %260 = vmatpush1.msra.mxu0 %v208
  %261 = vmatprep.subr.mxu0 0.0
  %262 = vmatpush1.msra.mxu0 %v209
  %263 = vmatprep.subr.mxu0 0.0
  %264 = vmatpush1.msra.mxu0 %v210
  %265 = vmatprep.subr.mxu0 0.0
  %266 = vmatpush1.msra.mxu0 %v211
  %267 = vmatprep.subr.mxu0 0.0
  %268 = vmatpush1.msra.mxu0 %v212
  %269 = vmatprep.subr.mxu0 0.0
  %270 = vmatpush1.msra.mxu0 %v213
  %271 = vmatprep.subr.mxu0 0.0
  %272 = vmatpush1.msra.mxu0 %v214
  %273 = vmatprep.subr.mxu0 0.0
  %274 = vmatpush1.msra.mxu0 %v215
  %275 = vmatprep.subr.mxu0 0.0
  %276 = vmatpush1.msra.mxu0 %v216
  %277 = vmatprep.subr.mxu0 0.0
  %278 = vmatpush1.msra.mxu0 %v217
  %279 = vmatprep.subr.mxu0 0.0
  %280 = vmatpush1.msra.mxu0 %v218
  %281 = vmatprep.subr.mxu0 0.0
  %282 = vmatpush1.msra.mxu0 %v219
  %283 = vmatprep.subr.mxu0 0.0
  %284 = vmatpush1.msra.mxu0 %v220
  %285 = vmatprep.subr.mxu0 0.0
  %286 = vmatpush1.msra.mxu0 %v221
  %287 = vmatprep.subr.mxu0 0.0
  %288 = vmatpush1.msra.mxu0 %v222
  %289 = vmatprep.subr.mxu0 0.0
  %290 = vmatpush1.msra.mxu0 %v223
  %291 = vmatprep.subr.mxu0 0.0
  %292 = vmatpush1.msra.mxu0 %v224
  %293 = vmatprep.subr.mxu0 0.0
  %294 = vmatpush1.msra.mxu0 %v225
  %295 = vmatprep.subr.mxu0 0.0
  %296 = vmatpush1.msra.mxu0 %v226
  %297 = vmatprep.subr.mxu0 0.0
  %298 = vmatpush1.msra.mxu0 %v227
  %299 = vmatprep.mubr.f32.mxu0 %v181
  %300 = vmatmul.mubr.f32.gmra.mrb[0].mxu0 %v180
  %v301 = vpop.f32.mrb[0].mxu0
  %v302 = vadd.f32 %v233, %v301
  %v303 = vpop.f32.mrb[0].mxu0
  %304 = vmatprep.mubr.f32.mxu0 %v183
  %305 = vmatmul.mubr.f32.gmra.mrb[0].mxu0 %v182
  %v306 = vpop.f32.mrb[0].mxu0
  %v307 = vadd.f32 %v233, %v306
  %v308 = vpop.f32.mrb[0].mxu0
  %309 = vmatprep.mubr.f32.mxu0 %v185
  %310 = vmatmul.mubr.f32.gmra.mrb[0].mxu0 %v184
  %v311 = vpop.f32.mrb[0].mxu0
  %v312 = vadd.f32 %v233, %v311
  %v313 = vpop.f32.mrb[0].mxu0
  %314 = vmatprep.mubr.f32.mxu0 %v187
  %315 = vmatmul.mubr.f32.gmra.mrb[0].mxu0 %v186
  %v316 = vpop.f32.mrb[0].mxu0
  %v317 = vadd.f32 %v233, %v316
  %v318 = vpop.f32.mrb[0].mxu0
  %319 = vmatprep.mubr.f32.mxu0 %v189
  %320 = vmatmul.mubr.f32.gmra.mrb[0].mxu0 %v188
  %v321 = vpop.f32.mrb[0].mxu0
  %v322 = vadd.f32 %v233, %v321
  %v323 = vpop.f32.mrb[0].mxu0
  %324 = vmatprep.mubr.f32.mxu0 %v191
  %325 = vmatmul.mubr.f32.gmra.mrb[0].mxu0 %v190
  %v326 = vpop.f32.mrb[0].mxu0
  %v327 = vadd.f32 %v233, %v326
  %v328 = vpop.f32.mrb[0].mxu0
  %329 = vmatprep.mubr.f32.mxu0 %v193
  %330 = vmatmul.mubr.f32.gmra.mrb[0].mxu0 %v192
  %v331 = vpop.f32.mrb[0].mxu0
  %v332 = vadd.f32 %v233, %v331
  %v333 = vpop.f32.mrb[0].mxu0
  %334 = vmatprep.mubr.f32.mxu0 %v195
  %335 = vmatmul.mubr.f32.gmra.mrb[0].mxu0 %v194
  %v336 = vpop.f32.mrb[0].mxu0
  %v337 = vadd.f32 %v233, %v336
  %v338 = vpop.f32.mrb[0].mxu0
  %339 = vdwg.mxu0
  %vm340 = vcmask 31744
  %v341 = vsel %vm340, %v302, -inf
  %342 = vmax.xlane.f32.xlu0 %v341
  %v343 = vpop.xlane.xlu0 %342
  %v344 = vsel %vm340, %v307, -inf
  %345 = vmax.xlane.f32.xlu0 %v344
  %v346 = vpop.xlane.xlu0 %345
  %v347 = vsel %vm340, %v312, -inf
  %348 = vmax.xlane.f32.xlu0 %v347
  %v349 = vpop.xlane.xlu0 %348
  %v350 = vsel %vm340, %v317, -inf
  %351 = vmax.xlane.f32.xlu0 %v350
  %v352 = vpop.xlane.xlu0 %351
  %v353 = vsel %vm340, %v322, -inf
  %354 = vmax.xlane.f32.xlu0 %v353
  %v355 = vpop.xlane.xlu0 %354
  %v356 = vsel %vm340, %v327, -inf
  %357 = vmax.xlane.f32.xlu0 %v356
  %v358 = vpop.xlane.xlu0 %357
  %v359 = vsel %vm340, %v332, -inf
  %360 = vmax.xlane.f32.xlu0 %v359
  %v361 = vpop.xlane.xlu0 %360
  %v362 = vsel %vm340, %v337, -inf
  %363 = vmax.xlane.f32.xlu0 %v362
  %v364 = vpop.xlane.xlu0 %363
  %v365 = vsub.f32 %v302, %v343
  %v366 = vsub.f32 %v307, %v346
  %v367 = vsub.f32 %v312, %v349
  %v368 = vsub.f32 %v317, %v352
  %v369 = vsub.f32 %v322, %v355
  %v370 = vsub.f32 %v327, %v358
  %v371 = vsub.f32 %v332, %v361
  %v372 = vsub.f32 %v337, %v364
  %v373 = vmul.f32 %v365, 1.442695
  %v374 = vpow.pop %v373
  %v375 = vmul.f32 %v366, 1.442695
  %v376 = vpow.pop %v375
  %v377 = vmul.f32 %v367, 1.442695
  %v378 = vpow.pop %v377
  %v379 = vmul.f32 %v368, 1.442695
  %v380 = vpow.pop %v379
  %v381 = vmul.f32 %v369, 1.442695
  %v382 = vpow.pop %v381
  %v383 = vmul.f32 %v370, 1.442695
  %v384 = vpow.pop %v383
  %v385 = vmul.f32 %v371, 1.442695
  %v386 = vpow.pop %v385
  %v387 = vmul.f32 %v372, 1.442695
  %v388 = vpow.pop %v387
  %v389 = vsel %vm340, %v374, 0.0
  %390 = vadd.xlane.f32.xlu0 %v389
  %v391 = vpop.xlane.xlu0 %390
  %v392 = vsel %vm340, %v376, 0.0
  %393 = vadd.xlane.f32.xlu0 %v392
  %v394 = vpop.xlane.xlu0 %393
  %v395 = vsel %vm340, %v378, 0.0
  %396 = vadd.xlane.f32.xlu0 %v395
  %v397 = vpop.xlane.xlu0 %396
  %v398 = vsel %vm340, %v380, 0.0
  %399 = vadd.xlane.f32.xlu0 %v398
  %v400 = vpop.xlane.xlu0 %399
  %v401 = vsel %vm340, %v382, 0.0
  %402 = vadd.xlane.f32.xlu0 %v401
  %v403 = vpop.xlane.xlu0 %402
  %v404 = vsel %vm340, %v384, 0.0
  %405 = vadd.xlane.f32.xlu0 %v404
  %v406 = vpop.xlane.xlu0 %405
  %v407 = vsel %vm340, %v386, 0.0
  %408 = vadd.xlane.f32.xlu0 %v407
  %v409 = vpop.xlane.xlu0 %408
  %v410 = vsel %vm340, %v388, 0.0
  %411 = vadd.xlane.f32.xlu0 %v410
  %v412 = vpop.xlane.xlu0 %411
  %v413 = vrcp.pop %v391
  %v414 = vmul.f32 %v374, %v413
  %v415 = vrcp.pop %v394
  %v416 = vmul.f32 %v376, %v415
  %v417 = vrcp.pop %v397
  %v418 = vmul.f32 %v378, %v417
  %v419 = vrcp.pop %v400
  %v420 = vmul.f32 %v380, %v419
  %v421 = vrcp.pop %v403
  %v422 = vmul.f32 %v382, %v421
  %v423 = vrcp.pop %v406
  %v424 = vmul.f32 %v384, %v423
  %v425 = vrcp.pop %v409
  %v426 = vmul.f32 %v386, %v425
  %v427 = vrcp.pop %v412
  %v428 = vmul.f32 %v388, %v427
  %429 = vst.msk [vmem:[%s5] sm:$0xff] %vm340, %v414
  %430 = vst.msk [vmem:[%s5 + $0x8] sm:$0xff] %vm340, %v416
  %431 = vst.msk [vmem:[%s5 + $0x10] sm:$0xff] %vm340, %v418
  %432 = vst.msk [vmem:[%s5 + $0x18] sm:$0xff] %vm340, %v420
  %433 = vst.msk [vmem:[%s5 + $0x20] sm:$0xff] %vm340, %v422
  %434 = vst.msk [vmem:[%s5 + $0x28] sm:$0xff] %vm340, %v424
  %435 = vst.msk [vmem:[%s5 + $0x30] sm:$0xff] %vm340, %v426
  %436 = vst.msk [vmem:[%s5 + $0x38] sm:$0xff] %vm340, %v428
  // Predicated region
  $region22: #{tpu_custom_call.1} parent=0 // pred_check
    _
  $region23: #{tpu_custom_call.1} parent=0 // pred_check_branch
    %438 = sbr.rel (0) target = $region25
  $region24: #{tpu_custom_call.1} parent=0 // pred_region
    _
  $region25: #{tpu_custom_call.1} parent=0 // pred_fallthru
    _
  // Predicated region
  $region26: #{tpu_custom_call.1} parent=0 // pred_check
    _
  $region27: #{tpu_custom_call.1} parent=0 // pred_check_branch
    %440 = sbr.rel (0) target = $region29
  $region28: #{tpu_custom_call.1} parent=0 // pred_region
    _
  $region29: #{tpu_custom_call.1} parent=0 // pred_fallthru
    _

</llo_original>
